<compile_context>
chip_gen: v7x
topology: tpu7x:2x2x1
jax: 0.10.0
libtpu: 0.0.40
codegen_flags: <defaults>
</compile_context>

<pallas_src>
import jax
import jax.numpy as jnp
from jax import lax
from jax.experimental import pallas as pl
from jax.experimental.pallas import tpu as pltpu

BN_EPS = 1e-5


def _kdq_kernel(x_ref, ck_ref, cv_ref, codes_ref, out_ref, reg_ref):
    x = x_ref[...]                       # (tD, B, d_in)  f32, d-major tile
    ck = ck_ref[...]                     # (tD, K, d_in)  f32
    cv = cv_ref[...]                     # (tD, K, d_out) f32
    tD, B, _ = x.shape
    K = ck.shape[1]

    # response[d,b,k] = <x[d,b,:], ck[d,k,:]>.  Leading-batch-dim einsum:
    # lowers to batched MXU matmuls with no relayouts (flash-attention pattern).
    resp = jnp.einsum('dbi,dki->dbk', x, ck,
                      preferred_element_type=jnp.float32)        # (tD, B, K)

    # BatchNorm1d(D, affine=False), training mode: per-d batch stats over (b,k).
    # One pass: mean = E[r], var = E[r^2] - E[r]^2 (biased, fp guard >= 0).
    inv_n = 1.0 / float(B * K)
    s = jnp.sum(jnp.sum(resp, axis=2, keepdims=True), axis=1, keepdims=True)
    ss = jnp.sum(jnp.sum(resp * resp, axis=2, keepdims=True), axis=1,
                 keepdims=True)
    mean = s * inv_n                                             # (tD, 1, 1)
    var = jnp.maximum(ss * inv_n - mean * mean, 0.0)             # (tD, 1, 1)
    resp = (resp - mean) * lax.rsqrt(var + BN_EPS)

    # codes = argmax over k (first index of the max, matching torch.argmax).
    k_iota = lax.broadcasted_iota(jnp.int32, resp.shape, 2)      # (tD, B, K)
    max_v = jnp.max(resp, axis=-1, keepdims=True)
    codes = jnp.min(jnp.where(resp >= max_v, k_iota, K), axis=-1)  # (tD, B) i32

    # tie_in_n_out=True: gather value centroids via a one-hot MXU matmul
    # (exact first-max one-hot; K is tiny so this contraction is cheap).
    onehot = (k_iota == codes[:, :, None]).astype(jnp.float32)   # (tD, B, K)
    outputs = jnp.einsum('dbk,dko->dbo', onehot, cv,
                         preferred_element_type=jnp.float32)     # (tD, B, d_out)

    codes_ref[...] = codes
    out_ref[...] = outputs          # straight-through: forward value == outputs

    # Per-tile partial sum of squared error (alpha=1, beta=0, gamma=0).
    # Broadcast into one full 8x128 f32 vreg => unmasked, lane-dense store.
    sq = jnp.sum((outputs - x) ** 2)
    reg_ref[...] = jnp.broadcast_to(sq, reg_ref.shape)


def _pick_tile_d(D, max_tile_d=128):
    """Largest divisor of D that is a multiple of 8 and <= max_tile_d, else D."""
    if D <= max_tile_d:
        return D
    for t in range(max_tile_d, 7, -1):
        if t % 8 == 0 and D % t == 0:
            return t
    return D  # TODO(synk): pad awkward D (e.g. large odd D) instead of one tile.


def _vmem_limit_bytes(tile_bytes):
    # 2x double-buffered tiles + in-flight intermediates + headroom, clamped so
    # it never exceeds v7x's 64 MiB/TC physical VMEM (v5e/v6e have 128 MiB).
    want = 6 * tile_bytes + (16 << 20)
    return int(min(max(want, 32 << 20), 64 << 20))


def kd_quantizer_forward(inputs, centroids_k, centroids_v, *, max_tile_d=128):
    """Pallas KDQuantizer forward. Returns (codes, outputs_final, losses)."""
    B, D, d_in = inputs.shape
    Dk, K, d_out = centroids_v.shape
    assert Dk == D and centroids_k.shape == (D, K, d_in)
    assert d_out == d_in  # tie_in_n_out=True ties value/key centroid dims.

    tD = _pick_tile_d(D, max_tile_d)
    n_tiles = D // tD

    # Layout plumbing in the wrapper: d-major input so the kernel's matmuls are
    # leading-batch-dim (relayout-free).  B stays whole inside every tile so
    # the BatchNorm batch statistics remain exact.
    x_dm = jnp.transpose(inputs, (1, 0, 2))                      # (D, B, d_in)

    tile_bytes = 4 * tD * (B * d_in + K * d_in + K * d_out + B * d_out + B)

    codes_dm, out_dm, reg_part = pl.pallas_call(
        _kdq_kernel,
        grid=(n_tiles,),
        in_specs=[
            pl.BlockSpec((tD, B, d_in), lambda i: (i, 0, 0)),
            pl.BlockSpec((tD, K, d_in), lambda i: (i, 0, 0)),
            pl.BlockSpec((tD, K, d_out), lambda i: (i, 0, 0)),
        ],
        out_specs=(
            pl.BlockSpec((tD, B), lambda i: (i, 0)),
            pl.BlockSpec((tD, B, d_out), lambda i: (i, 0, 0)),
            pl.BlockSpec((1, 8, 128), lambda i: (i, 0, 0)),
        ),
        out_shape=(
            jax.ShapeDtypeStruct((D, B), jnp.int32),          # codes (torch: int64)
            jax.ShapeDtypeStruct((D, B, d_out), jnp.float32),  # outputs_final
            jax.ShapeDtypeStruct((n_tiles, 8, 128), jnp.float32),  # reg partials
        ),
        compiler_params=pltpu.CompilerParams(
            dimension_semantics=("parallel",),
            vmem_limit_bytes=_vmem_limit_bytes(tile_bytes)),
    )(x_dm, centroids_k, centroids_v)

    codes = codes_dm.T                                            # (B, D)
    outputs = jnp.transpose(out_dm, (1, 0, 2))                    # (B, D, d_out)
    reg = jnp.sum(reg_part[:, 0, 0]) / float(B * D * d_out)
    losses = {"regulization_loss": reg}
    return codes, outputs, losses


def _reference_forward(inputs, centroids_k, centroids_v):
    """Pure-JAX reference (same config) for a correctness sanity check."""
    resp = jnp.einsum('bdi,dki->bdk', inputs, centroids_k,
                      precision=lax.Precision.HIGHEST)
    mean = jnp.mean(resp, axis=(0, 2), keepdims=True)
    var = jnp.mean((resp - mean) ** 2, axis=(0, 2), keepdims=True)
    resp = (resp - mean) / jnp.sqrt(var + BN_EPS)
    codes = jnp.argmax(resp, axis=-1).astype(jnp.int32)
    outputs = jnp.take_along_axis(
        jnp.broadcast_to(centroids_v[None],
                         (inputs.shape[0],) + centroids_v.shape),
        codes[:, :, None, None], axis=2)[:, :, 0, :]
    reg = jnp.mean((outputs - inputs) ** 2)
    return codes, outputs, reg


if __name__ == "__main__":
    def _run_case(B, D, K, d_in):
        d_out = d_in  # tie_in_n_out=True
        key = jax.random.PRNGKey(0)
        k_inp, k_cent = jax.random.split(key)
        centroids_k = jax.random.normal(k_cent, (D, K, d_in), dtype=jnp.float32)
        centroids_v = centroids_k  # tied (vector quantization)
        inputs = jax.random.normal(k_inp, (B, D, d_in), dtype=jnp.float32)

        codes, outs, losses = kd_quantizer_forward(inputs, centroids_k,
                                                   centroids_v)
        jax.block_until_ready((codes, outs, losses["regulization_loss"]))

        # Sanity check against the pure-JAX reference.
        ref_codes, ref_outs, ref_reg = _reference_forward(
            inputs, centroids_k, centroids_v)
        assert codes.shape == (B, D) and outs.shape == (B, D, d_out)
        assert bool(jnp.all(codes == ref_codes))
        assert bool(jnp.allclose(outs, ref_outs, atol=1e-5, rtol=1e-5))
        assert bool(jnp.allclose(losses["regulization_loss"], ref_reg,
                                 atol=1e-5, rtol=1e-5))

    # Small module-default shapes: single grid step, full-extent blocks.
    _run_case(B=8, D=4, K=16, d_in=32)
    # Larger D: exercises the tiled, double-buffered, "parallel" grid (tD=128).
    _run_case(B=8, D=256, K=16, d_in=32)

    print("KERNEL_OK")
</pallas_src>

<mosaic_0001>
module attributes {stable_mosaic.version = 11 : i64} {
  func.func @_kdq_kernel(%arg0: i32, %arg1: memref<4x8x32xf32, #tpu.memory_space<vmem>>, %arg2: memref<4x16x32xf32, #tpu.memory_space<vmem>>, %arg3: memref<4x16x32xf32, #tpu.memory_space<vmem>>, %arg4: memref<4x8xi32, #tpu.memory_space<vmem>>, %arg5: memref<4x8x32xf32, #tpu.memory_space<vmem>>, %arg6: memref<1x8x128xf32, #tpu.memory_space<vmem>>) attributes {dimension_semantics = [#tpu.dimension_semantics<parallel>], iteration_bounds = array<i64: 1>, scalar_prefetch = 0 : i64, scratch_operands = 0 : i64, tpu.core_type = #tpu.core_type<tc>, window_params = [{transform_indices = @transform_0, window_bounds = array<i64: 4, 8, 32>}, {transform_indices = @transform_1, window_bounds = array<i64: 4, 16, 32>}, {transform_indices = @transform_2, window_bounds = array<i64: 4, 16, 32>}, {transform_indices = @transform_3, window_bounds = array<i64: 4, 8>}, {transform_indices = @transform_4, window_bounds = array<i64: 4, 8, 32>}, {transform_indices = @transform_5, window_bounds = array<i64: 1, 8, 128>}]} {
    %c0 = arith.constant 0 : index
    %c0_0 = arith.constant 0 : index
    %c0_1 = arith.constant 0 : index
    %0 = vector.load %arg1[%c0, %c0_0, %c0_1] : memref<4x8x32xf32, #tpu.memory_space<vmem>>, vector<4x8x32xf32>
    %c0_2 = arith.constant 0 : index
    %c0_3 = arith.constant 0 : index
    %c0_4 = arith.constant 0 : index
    %1 = vector.load %arg2[%c0_2, %c0_3, %c0_4] : memref<4x16x32xf32, #tpu.memory_space<vmem>>, vector<4x16x32xf32>
    %c0_5 = arith.constant 0 : index
    %c0_6 = arith.constant 0 : index
    %c0_7 = arith.constant 0 : index
    %2 = vector.load %arg3[%c0_5, %c0_6, %c0_7] : memref<4x16x32xf32, #tpu.memory_space<vmem>>, vector<4x16x32xf32>
    "tpu.trace_start"() <{level = 10 : i32, message = "dbi,dki->dbk"}> : () -> ()
    %cst = arith.constant dense<0.000000e+00> : vector<4x8x16xf32>
    %3 = tpu.matmul %0, %1, %cst {dimension_numbers = #tpu.dot_dimension_numbers<[2], [2], [1], [1], [0, 0, 0, 1, 1, 1], [0], [0]>} : vector<4x8x32xf32>, vector<4x16x32xf32>, vector<4x8x16xf32> -> vector<4x8x16xf32>
    "tpu.trace_stop"() : () -> ()
    %cst_8 = arith.constant dense<0.000000e+00> : vector<4x8xf32>
    %4 = vector.multi_reduction <add>, %3, %cst_8 [2] : vector<4x8x16xf32> to vector<4x8xf32>
    %5 = vector.shape_cast %4 : vector<4x8xf32> to vector<4x8x1xf32>
    %cst_9 = arith.constant dense<0.000000e+00> : vector<4x1xf32>
    %6 = vector.multi_reduction <add>, %5, %cst_9 [1] : vector<4x8x1xf32> to vector<4x1xf32>
    %7 = vector.shape_cast %6 : vector<4x1xf32> to vector<4x1x1xf32>
    %8 = arith.mulf %3, %3 : vector<4x8x16xf32>
    %cst_10 = arith.constant dense<0.000000e+00> : vector<4x8xf32>
    %9 = vector.multi_reduction <add>, %8, %cst_10 [2] : vector<4x8x16xf32> to vector<4x8xf32>
    %10 = vector.shape_cast %9 : vector<4x8xf32> to vector<4x8x1xf32>
    %cst_11 = arith.constant dense<0.000000e+00> : vector<4x1xf32>
    %11 = vector.multi_reduction <add>, %10, %cst_11 [1] : vector<4x8x1xf32> to vector<4x1xf32>
    %12 = vector.shape_cast %11 : vector<4x1xf32> to vector<4x1x1xf32>
    %cst_12 = arith.constant 7.812500e-03 : f32
    %13 = vector.broadcast %cst_12 : f32 to vector<4x1x1xf32>
    %14 = arith.mulf %7, %13 : vector<4x1x1xf32>
    %cst_13 = arith.constant 7.812500e-03 : f32
    %15 = vector.broadcast %cst_13 : f32 to vector<4x1x1xf32>
    %16 = arith.mulf %12, %15 : vector<4x1x1xf32>
    %17 = arith.mulf %14, %14 : vector<4x1x1xf32>
    %18 = arith.subf %16, %17 : vector<4x1x1xf32>
    %cst_14 = arith.constant 0.000000e+00 : f32
    %19 = vector.broadcast %cst_14 : f32 to vector<4x1x1xf32>
    %20 = arith.maximumf %18, %19 : vector<4x1x1xf32>
    %21 = vector.broadcast %14 : vector<4x1x1xf32> to vector<4x8x16xf32>
    %22 = arith.subf %3, %21 : vector<4x8x16xf32>
    %cst_15 = arith.constant 9.99999974E-6 : f32
    %23 = vector.broadcast %cst_15 : f32 to vector<4x1x1xf32>
    %24 = arith.addf %20, %23 : vector<4x1x1xf32>
    %25 = math.rsqrt %24 : vector<4x1x1xf32>
    %26 = vector.broadcast %25 : vector<4x1x1xf32> to vector<4x8x16xf32>
    %27 = arith.mulf %22, %26 : vector<4x8x16xf32>
    %28 = tpu.iota {dimensions = array<i32: 2>} : vector<4x8x16xi32>
    %cst_16 = arith.constant dense<0xFF800000> : vector<4x8xf32>
    %29 = vector.multi_reduction <maximumf>, %27, %cst_16 [2] : vector<4x8x16xf32> to vector<4x8xf32>
    %30 = vector.shape_cast %29 : vector<4x8xf32> to vector<4x8x1xf32>
    %31 = vector.broadcast %30 : vector<4x8x1xf32> to vector<4x8x16xf32>
    %32 = arith.cmpf oge, %27, %31 : vector<4x8x16xf32>
    %c16_i32 = arith.constant 16 : i32
    %33 = vector.broadcast %c16_i32 : i32 to vector<4x8x16xi32>
    %34 = arith.select %32, %28, %33 : vector<4x8x16xi1>, vector<4x8x16xi32>
    %cst_17 = arith.constant dense<2147483647> : vector<4x8xi32>
    %35 = vector.multi_reduction <minsi>, %34, %cst_17 [2] : vector<4x8x16xi32> to vector<4x8xi32>
    %36 = vector.shape_cast %35 : vector<4x8xi32> to vector<4x8x1xi32>
    %37 = vector.broadcast %36 : vector<4x8x1xi32> to vector<4x8x16xi32>
    %38 = arith.cmpi eq, %28, %37 : vector<4x8x16xi32>
    %39 = arith.extui %38 : vector<4x8x16xi1> to vector<4x8x16xi32>
    %40 = arith.sitofp %39 : vector<4x8x16xi32> to vector<4x8x16xf32>
    "tpu.trace_start"() <{level = 10 : i32, message = "dbk,dko->dbo"}> : () -> ()
    %cst_18 = arith.constant dense<0.000000e+00> : vector<4x8x32xf32>
    %41 = tpu.matmul %40, %2, %cst_18 {dimension_numbers = #tpu.dot_dimension_numbers<[2], [1], [1], [2], [0, 0, 0, 1, 1, 2], [0], [0]>} : vector<4x8x16xf32>, vector<4x16x32xf32>, vector<4x8x32xf32> -> vector<4x8x32xf32>
    "tpu.trace_stop"() : () -> ()
    %c0_19 = arith.constant 0 : index
    %c0_20 = arith.constant 0 : index
    %42 = vector.load %arg4[%c0_19, %c0_20] : memref<4x8xi32, #tpu.memory_space<vmem>>, vector<4x8xi32>
    tpu.vector_store %arg4[%c0_19, %c0_20], %35 {strides = array<i32>} : memref<4x8xi32, #tpu.memory_space<vmem>>, vector<4x8xi32>,
    %c0_21 = arith.constant 0 : index
    %c0_22 = arith.constant 0 : index
    %c0_23 = arith.constant 0 : index
    %43 = vector.load %arg5[%c0_21, %c0_22, %c0_23] : memref<4x8x32xf32, #tpu.memory_space<vmem>>, vector<4x8x32xf32>
    tpu.vector_store %arg5[%c0_21, %c0_22, %c0_23], %41 {strides = array<i32>} : memref<4x8x32xf32, #tpu.memory_space<vmem>>, vector<4x8x32xf32>,
    %44 = arith.subf %41, %0 : vector<4x8x32xf32>
    %45 = arith.mulf %44, %44 : vector<4x8x32xf32>
    %46 = vector.shape_cast %45 : vector<4x8x32xf32> to vector<1x4x8x32xf32>
    %cst_24 = arith.constant dense<0.000000e+00> : vector<1xf32>
    %47 = vector.multi_reduction <add>, %46, %cst_24 [1, 2, 3] : vector<1x4x8x32xf32> to vector<1xf32>
    %48 = vector.shape_cast %47 : vector<1xf32> to vector<1x1x1x1xf32>
    %49 = vector.extract %48[0, 0, 0, 0] : f32 from vector<1x1x1x1xf32>
    %50 = vector.broadcast %49 : f32 to vector<1x8x128xf32>
    %c0_25 = arith.constant 0 : index
    %c0_26 = arith.constant 0 : index
    %c0_27 = arith.constant 0 : index
    %51 = vector.load %arg6[%c0_25, %c0_26, %c0_27] : memref<1x8x128xf32, #tpu.memory_space<vmem>>, vector<1x8x128xf32>
    tpu.vector_store %arg6[%c0_25, %c0_26, %c0_27], %50 {strides = array<i32>} : memref<1x8x128xf32, #tpu.memory_space<vmem>>, vector<1x8x128xf32>,
    return
  }
  func.func @transform_0(%arg0: i32) -> (i32, i32, i32) {
    %c0_i32 = arith.constant 0 : i32
    %c0_i32_0 = arith.constant 0 : i32
    %c0_i32_1 = arith.constant 0 : i32
    return %arg0, %c0_i32, %c0_i32_0 : i32, i32, i32
  }
  func.func @transform_1(%arg0: i32) -> (i32, i32, i32) {
    %c0_i32 = arith.constant 0 : i32
    %c0_i32_0 = arith.constant 0 : i32
    %c0_i32_1 = arith.constant 0 : i32
    return %arg0, %c0_i32, %c0_i32_0 : i32, i32, i32
  }
  func.func @transform_2(%arg0: i32) -> (i32, i32, i32) {
    %c0_i32 = arith.constant 0 : i32
    %c0_i32_0 = arith.constant 0 : i32
    %c0_i32_1 = arith.constant 0 : i32
    return %arg0, %c0_i32, %c0_i32_0 : i32, i32, i32
  }
  func.func @transform_3(%arg0: i32) -> (i32, i32) {
    %c0_i32 = arith.constant 0 : i32
    %c0_i32_0 = arith.constant 0 : i32
    return %arg0, %c0_i32 : i32, i32
  }
  func.func @transform_4(%arg0: i32) -> (i32, i32, i32) {
    %c0_i32 = arith.constant 0 : i32
    %c0_i32_0 = arith.constant 0 : i32
    %c0_i32_1 = arith.constant 0 : i32
    return %arg0, %c0_i32, %c0_i32_0 : i32, i32, i32
  }
  func.func @transform_5(%arg0: i32) -> (i32, i32, i32) {
    %c0_i32 = arith.constant 0 : i32
    %c0_i32_0 = arith.constant 0 : i32
    %c0_i32_1 = arith.constant 0 : i32
    return %arg0, %c0_i32, %c0_i32_0 : i32, i32, i32
  }
}

</mosaic_0001>

<llo_original>
// kernel: tpu_custom_call.1
$region0: #{tpu_custom_call.1}
  #allocation0 [shape = 'u32[]', space=smem, size = 0x4, offset = 0x4, fixed_abs, tag = 'smem constant byte address 0x4 - core index']
  #allocation1 [shape = 'u32[144,128]{1,0:T(1,128)}', space=vmem, size = 0x12000, scoped, tag = 'internal scratch']
  %s0 = inlined_call_operand.hbm [shape: f32[4,8,32], index: 0, kind: input, shape index: {}]
  %s1 = inlined_call_operand.hbm [shape: f32[4,16,32], index: 1, kind: input, shape index: {}]
  %s2 = inlined_call_operand.hbm [shape: f32[4,16,32], index: 2, kind: input, shape index: {}]
  %s3 = inlined_call_operand.hbm [shape: s32[4,8], index: 3, kind: output, shape index: {0}]
  %s4 = inlined_call_operand.hbm [shape: f32[4,8,32], index: 4, kind: output, shape index: {1}]
  %s5 = inlined_call_operand.hbm [shape: f32[1,8,128], index: 5, kind: output, shape index: {2}]
  %6 = xla_tuple %s3, %s4, %s5
  %s7 = sld [smem:[#allocation0]]
  $region50: #{tpu_custom_call.1} parent=0
    _
  %s9 = ssub.s32 1, %s7
  %s10 = scalar_select 0, %s9, %s7
  $region1: #{tpu_custom_call.1} parent=0
    #allocation2 [shape = 'u8[16384]{0}', space=vmem, size = 0x4000, scoped, tag = 'input window, operand 0, single buffered']
    #allocation3 [shape = 's32[1]{0}', space=sflag, size = 0x4, scoped, tag = 'scoped memory for tpu_custom_call.1']
    #allocation4 [shape = 's32[1]{0}', space=sflag, size = 0x4, scoped, tag = 'scoped memory for tpu_custom_call.1']
    #allocation5 [shape = 'u8[32768]{0}', space=vmem, size = 0x8000, scoped, tag = 'input window, operand 1, single buffered']
    #allocation6 [shape = 's32[1]{0}', space=sflag, size = 0x4, scoped, tag = 'scoped memory for tpu_custom_call.1']
    #allocation7 [shape = 'u8[32768]{0}', space=vmem, size = 0x8000, scoped, tag = 'input window, operand 2, single buffered']
    #allocation8 [shape = 'u8[2048]{0}', space=vmem, size = 0x800, scoped, tag = 'output window, operand 0, single buffered']
    #allocation9 [shape = 'u8[16384]{0}', space=vmem, size = 0x4000, scoped, tag = 'output window, operand 1, single buffered']
    #allocation10 [shape = 's32[1]{0}', space=sflag, size = 0x4, scoped, tag = 'scoped memory for tpu_custom_call.1']
    #allocation11 [shape = 'u8[4096]{0}', space=vmem, size = 0x1000, scoped, tag = 'output window, operand 2, single buffered']
    %11 = vsyncpa [#allocation3], 0
    %12 = vsyncpa [#allocation6], 0
    %13 = vsyncpa [#allocation4], 0
    %14 = vsyncpa [#allocation10], 0
    // Predicated region
    $region2: #{tpu_custom_call.1} parent=1 // pred_check
      _
    $region3: #{tpu_custom_call.1} parent=1 // pred_check_branch
      %16 = sbr.rel (0) target = $region5
    $region4: #{tpu_custom_call.1} parent=1 // pred_region
      %s18 = ssub.s32 512, 512
      %19 = vsyncadd [#allocation3], %s18
      %s20 = sshll.u32 [#allocation2], 4
      %s21 = int_to_ptr.vmem [resolvable:$true] %s20
      %26 = dma.hbm_to_vmem [thread:$0]  %s0, 512, %s21, [#allocation3], 128, 128, 8
    $region5: #{tpu_custom_call.1} parent=1 // pred_fallthru
      _
    // Predicated region
    $region6: #{tpu_custom_call.1} parent=1 // pred_check
      _
    $region7: #{tpu_custom_call.1} parent=1 // pred_check_branch
      %28 = sbr.rel (0) target = $region9
    $region8: #{tpu_custom_call.1} parent=1 // pred_region
      %s30 = ssub.s32 1024, 1024
      %31 = vsyncadd [#allocation6], %s30
      %s32 = sshll.u32 [#allocation5], 4
      %s33 = int_to_ptr.vmem [resolvable:$true] %s32
      %38 = dma.hbm_to_vmem [thread:$0]  %s1, 1024, %s33, [#allocation6], 128, 128, 8
    $region9: #{tpu_custom_call.1} parent=1 // pred_fallthru
      _
    // Predicated region
    $region10: #{tpu_custom_call.1} parent=1 // pred_check
      _
    $region11: #{tpu_custom_call.1} parent=1 // pred_check_branch
      %40 = sbr.rel (0) target = $region13
    $region12: #{tpu_custom_call.1} parent=1 // pred_region
      %s42 = ssub.s32 1024, 1024
      %43 = vsyncadd [#allocation6], %s42
      %s44 = sshll.u32 [#allocation7], 4
      %s45 = int_to_ptr.vmem [resolvable:$true] %s44
      %50 = dma.hbm_to_vmem [thread:$0]  %s2, 1024, %s45, [#allocation6], 128, 128, 8
    $region13: #{tpu_custom_call.1} parent=1 // pred_fallthru
      _
    // Predicated region
    $region14: #{tpu_custom_call.1} parent=1 // pred_check
      _
    $region15: #{tpu_custom_call.1} parent=1 // pred_check_branch
      %52 = sbr.rel (0) target = $region17
    $region16: #{tpu_custom_call.1} parent=1 // pred_region
      %53 = dma.done [#allocation3], 512
    $region17: #{tpu_custom_call.1} parent=1 // pred_fallthru
      _
    // Predicated region
    $region18: #{tpu_custom_call.1} parent=1 // pred_check
      _
    $region19: #{tpu_custom_call.1} parent=1 // pred_check_branch
      %55 = sbr.rel (0) target = $region21
    $region20: #{tpu_custom_call.1} parent=1 // pred_region
      %56 = dma.done [#allocation6], 1024
    $region21: #{tpu_custom_call.1} parent=1 // pred_fallthru
      _
    // Predicated region
    $region22: #{tpu_custom_call.1} parent=1 // pred_check
      _
    $region23: #{tpu_custom_call.1} parent=1 // pred_check_branch
      %58 = sbr.rel (0) target = $region25
    $region24: #{tpu_custom_call.1} parent=1 // pred_region
      %59 = dma.done [#allocation6], 1024
    $region25: #{tpu_custom_call.1} parent=1 // pred_fallthru
      _
    %v60 = vld [vmem:[#allocation2] sm:$0xff]
    %v61 = vld [vmem:[#allocation2 + $0x8] sm:$0xff]
    %v62 = vld [vmem:[#allocation2 + $0x10] sm:$0xff]
    %v63 = vld [vmem:[#allocation2 + $0x18] sm:$0xff]
    %v64 = vld [vmem:[#allocation5] sm:$0xff]
    %v65 = vld [vmem:[#allocation5 + $0x8] sm:$0xff]
    %v66 = vld [vmem:[#allocation5 + $0x10] sm:$0xff]
    %v67 = vld [vmem:[#allocation5 + $0x18] sm:$0xff]
    %v68 = vld [vmem:[#allocation5 + $0x20] sm:$0xff]
    %v69 = vld [vmem:[#allocation5 + $0x28] sm:$0xff]
    %v70 = vld [vmem:[#allocation5 + $0x30] sm:$0xff]
    %v71 = vld [vmem:[#allocation5 + $0x38] sm:$0xff]
    %v72 = vld [vmem:[#allocation7] sm:$0xff]
    %v73 = vld [vmem:[#allocation7 + $0x8] sm:$0xff]
    %v74 = vld [vmem:[#allocation7 + $0x10] sm:$0xff]
    %v75 = vld [vmem:[#allocation7 + $0x18] sm:$0xff]
    %v76 = vld [vmem:[#allocation7 + $0x20] sm:$0xff]
    %v77 = vld [vmem:[#allocation7 + $0x28] sm:$0xff]
    %v78 = vld [vmem:[#allocation7 + $0x30] sm:$0xff]
    %v79 = vld [vmem:[#allocation7 + $0x38] sm:$0xff]
    %vm80 = vcmask 261120
    %v82 = vsel %vm80, %v60, 0
    %v85 = vsel %vm80, %v64, 0
    %v88 = vsel %vm80, %v65, 0
    %90 = vmatprep.subr.mxu0 0.0
    %91 = vmatpush1.xpose.msra.mxu0 %v85
    %92 = vmatprep.subr.mxu0 0.0
    %93 = vmatpush1.xpose.msra.mxu0 %v88
    %94 = vmatprep.subr.mxu0 0.0
    %95 = vmatpush1.xpose.msra.mxu0 0.0
    %96 = vmatprep.subr.mxu0 0.0
    %97 = vmatpush1.xpose.msra.mxu0 0.0
    %98 = vmatprep.subr.mxu0 0.0
    %99 = vmatpush1.xpose.msra.mxu0 0.0
    %100 = vmatprep.subr.mxu0 0.0
    %101 = vmatpush1.xpose.msra.mxu0 0.0
    %102 = vmatprep.subr.mxu0 0.0
    %103 = vmatpush1.xpose.msra.mxu0 0.0
    %104 = vmatprep.subr.mxu0 0.0
    %105 = vmatpush1.xpose.msra.mxu0 0.0
    %106 = vmatprep.subr.mxu0 0.0
    %107 = vmatpush1.xpose.msra.mxu0 0.0
    %108 = vmatprep.subr.mxu0 0.0
    %109 = vmatpush1.xpose.msra.mxu0 0.0
    %110 = vmatprep.subr.mxu0 0.0
    %111 = vmatpush1.xpose.msra.mxu0 0.0
    %112 = vmatprep.subr.mxu0 0.0
    %113 = vmatpush1.xpose.msra.mxu0 0.0
    %114 = vmatprep.subr.mxu0 0.0
    %115 = vmatpush1.xpose.msra.mxu0 0.0
    %116 = vmatprep.subr.mxu0 0.0
    %117 = vmatpush1.xpose.msra.mxu0 0.0
    %118 = vmatprep.subr.mxu0 0.0
    %119 = vmatpush1.xpose.msra.mxu0 0.0
    %120 = vmatprep.subr.mxu0 0.0
    %121 = vmatpush1.xpose.msra.mxu0 0.0
    %122 = vmatprep.subr.mxu0 0.0
    %123 = vmatpush1.xpose.msra.mxu0 0.0
    %124 = vmatprep.subr.mxu0 0.0
    %125 = vmatpush1.xpose.msra.mxu0 0.0
    %126 = vmatprep.subr.mxu0 0.0
    %127 = vmatpush1.xpose.msra.mxu0 0.0
    %128 = vmatprep.subr.mxu0 0.0
    %129 = vmatpush1.xpose.msra.mxu0 0.0
    %130 = vmatprep.subr.mxu0 0.0
    %131 = vmatpush1.xpose.msra.mxu0 0.0
    %132 = vmatprep.subr.mxu0 0.0
    %133 = vmatpush1.xpose.msra.mxu0 0.0
    %134 = vmatprep.subr.mxu0 0.0
    %135 = vmatpush1.xpose.msra.mxu0 0.0
    %136 = vmatprep.subr.mxu0 0.0
    %137 = vmatpush1.xpose.msra.mxu0 0.0
    %138 = vmatprep.subr.mxu0 0.0
    %139 = vmatpush1.xpose.msra.mxu0 0.0
    %140 = vmatprep.subr.mxu0 0.0
    %141 = vmatpush1.xpose.msra.mxu0 0.0
    %142 = vmatprep.subr.mxu0 0.0
    %143 = vmatpush1.xpose.msra.mxu0 0.0
    %144 = vmatprep.subr.mxu0 0.0
    %145 = vmatpush1.xpose.msra.mxu0 0.0
    %146 = vmatprep.subr.mxu0 0.0
    %147 = vmatpush1.xpose.msra.mxu0 0.0
    %148 = vmatprep.subr.mxu0 0.0
    %149 = vmatpush1.xpose.msra.mxu0 0.0
    %150 = vmatprep.subr.mxu0 0.0
    %151 = vmatpush1.xpose.msra.mxu0 0.0
    %152 = vmatprep.subr.mxu0 0.0
    %153 = vmatpush1.xpose.msra.mxu0 0.0
    %154 = vmatprep.mubr.f32.mxu0 0.0
    %155 = vmatmul.mubr.f32.gmra.mrb[0].mxu0 %v82
    %v156 = vpop.f32.mrb[0].mxu0
    %v157 = vadd.f32 0.0, %v156
    %v158 = vpop.f32.mrb[0].mxu0
    %159 = vdwg.mxu0
    %v161 = vsel %vm80, %v61, 0
    %v164 = vsel %vm80, %v66, 0
    %v167 = vsel %vm80, %v67, 0
    %169 = vmatprep.subr.mxu0 0.0
    %170 = vmatpush1.xpose.msra.mxu0 %v164
    %171 = vmatprep.subr.mxu0 0.0
    %172 = vmatpush1.xpose.msra.mxu0 %v167
    %173 = vmatprep.subr.mxu0 0.0
    %174 = vmatpush1.xpose.msra.mxu0 0.0
    %175 = vmatprep.subr.mxu0 0.0
    %176 = vmatpush1.xpose.msra.mxu0 0.0
    %177 = vmatprep.subr.mxu0 0.0
    %178 = vmatpush1.xpose.msra.mxu0 0.0
    %179 = vmatprep.subr.mxu0 0.0
    %180 = vmatpush1.xpose.msra.mxu0 0.0
    %181 = vmatprep.subr.mxu0 0.0
    %182 = vmatpush1.xpose.msra.mxu0 0.0
    %183 = vmatprep.subr.mxu0 0.0
    %184 = vmatpush1.xpose.msra.mxu0 0.0
    %185 = vmatprep.subr.mxu0 0.0
    %186 = vmatpush1.xpose.msra.mxu0 0.0
    %187 = vmatprep.subr.mxu0 0.0
    %188 = vmatpush1.xpose.msra.mxu0 0.0
    %189 = vmatprep.subr.mxu0 0.0
    %190 = vmatpush1.xpose.msra.mxu0 0.0
    %191 = vmatprep.subr.mxu0 0.0
    %192 = vmatpush1.xpose.msra.mxu0 0.0
    %193 = vmatprep.subr.mxu0 0.0
    %194 = vmatpush1.xpose.msra.mxu0 0.0
    %195 = vmatprep.subr.mxu0 0.0
    %196 = vmatpush1.xpose.msra.mxu0 0.0
    %197 = vmatprep.subr.mxu0 0.0
    %198 = vmatpush1.xpose.msra.mxu0 0.0
    %199 = vmatprep.subr.mxu0 0.0
    %200 = vmatpush1.xpose.msra.mxu0 0.0
    %201 = vmatprep.subr.mxu0 0.0
    %202 = vmatpush1.xpose.msra.mxu0 0.0
    %203 = vmatprep.subr.mxu0 0.0
    %204 = vmatpush1.xpose.msra.mxu0 0.0
    %205 = vmatprep.subr.mxu0 0.0
    %206 = vmatpush1.xpose.msra.mxu0 0.0
    %207 = vmatprep.subr.mxu0 0.0
    %208 = vmatpush1.xpose.msra.mxu0 0.0
    %209 = vmatprep.subr.mxu0 0.0
    %210 = vmatpush1.xpose.msra.mxu0 0.0
    %211 = vmatprep.subr.mxu0 0.0
    %212 = vmatpush1.xpose.msra.mxu0 0.0
    %213 = vmatprep.subr.mxu0 0.0
    %214 = vmatpush1.xpose.msra.mxu0 0.0
    %215 = vmatprep.subr.mxu0 0.0
    %216 = vmatpush1.xpose.msra.mxu0 0.0
    %217 = vmatprep.subr.mxu0 0.0
    %218 = vmatpush1.xpose.msra.mxu0 0.0
    %219 = vmatprep.subr.mxu0 0.0
    %220 = vmatpush1.xpose.msra.mxu0 0.0
    %221 = vmatprep.subr.mxu0 0.0
    %222 = vmatpush1.xpose.msra.mxu0 0.0
    %223 = vmatprep.subr.mxu0 0.0
    %224 = vmatpush1.xpose.msra.mxu0 0.0
    %225 = vmatprep.subr.mxu0 0.0
    %226 = vmatpush1.xpose.msra.mxu0 0.0
    %227 = vmatprep.subr.mxu0 0.0
    %228 = vmatpush1.xpose.msra.mxu0 0.0
    %229 = vmatprep.subr.mxu0 0.0
    %230 = vmatpush1.xpose.msra.mxu0 0.0
    %231 = vmatprep.subr.mxu0 0.0
    %232 = vmatpush1.xpose.msra.mxu0 0.0
    %233 = vmatprep.mubr.f32.mxu0 0.0
    %234 = vmatmul.mubr.f32.gmra.mrb[0].mxu0 %v161
    %v235 = vpop.f32.mrb[0].mxu0
    %v236 = vadd.f32 0.0, %v235
    %v237 = vpop.f32.mrb[0].mxu0
    %238 = vdwg.mxu0
    %v240 = vsel %vm80, %v62, 0
    %v243 = vsel %vm80, %v68, 0
    %v246 = vsel %vm80, %v69, 0
    %248 = vmatprep.subr.mxu0 0.0
    %249 = vmatpush1.xpose.msra.mxu0 %v243
    %250 = vmatprep.subr.mxu0 0.0
    %251 = vmatpush1.xpose.msra.mxu0 %v246
    %252 = vmatprep.subr.mxu0 0.0
    %253 = vmatpush1.xpose.msra.mxu0 0.0
    %254 = vmatprep.subr.mxu0 0.0
    %255 = vmatpush1.xpose.msra.mxu0 0.0
    %256 = vmatprep.subr.mxu0 0.0
    %257 = vmatpush1.xpose.msra.mxu0 0.0
    %258 = vmatprep.subr.mxu0 0.0
    %259 = vmatpush1.xpose.msra.mxu0 0.0
    %260 = vmatprep.subr.mxu0 0.0
    %261 = vmatpush1.xpose.msra.mxu0 0.0
    %262 = vmatprep.subr.mxu0 0.0
    %263 = vmatpush1.xpose.msra.mxu0 0.0
    %264 = vmatprep.subr.mxu0 0.0
    %265 = vmatpush1.xpose.msra.mxu0 0.0
    %266 = vmatprep.subr.mxu0 0.0
    %267 = vmatpush1.xpose.msra.mxu0 0.0
    %268 = vmatprep.subr.mxu0 0.0
    %269 = vmatpush1.xpose.msra.mxu0 0.0
    %270 = vmatprep.subr.mxu0 0.0
    %271 = vmatpush1.xpose.msra.mxu0 0.0
    %272 = vmatprep.subr.mxu0 0.0
    %273 = vmatpush1.xpose.msra.mxu0 0.0
    %274 = vmatprep.subr.mxu0 0.0
    %275 = vmatpush1.xpose.msra.mxu0 0.0
    %276 = vmatprep.subr.mxu0 0.0
    %277 = vmatpush1.xpose.msra.mxu0 0.0
    %278 = vmatprep.subr.mxu0 0.0
    %279 = vmatpush1.xpose.msra.mxu0 0.0
    %280 = vmatprep.subr.mxu0 0.0
    %281 = vmatpush1.xpose.msra.mxu0 0.0
    %282 = vmatprep.subr.mxu0 0.0
    %283 = vmatpush1.xpose.msra.mxu0 0.0
    %284 = vmatprep.subr.mxu0 0.0
    %285 = vmatpush1.xpose.msra.mxu0 0.0
    %286 = vmatprep.subr.mxu0 0.0
    %287 = vmatpush1.xpose.msra.mxu0 0.0
    %288 = vmatprep.subr.mxu0 0.0
    %289 = vmatpush1.xpose.msra.mxu0 0.0
    %290 = vmatprep.subr.mxu0 0.0
    %291 = vmatpush1.xpose.msra.mxu0 0.0
    %292 = vmatprep.subr.mxu0 0.0
    %293 = vmatpush1.xpose.msra.mxu0 0.0
    %294 = vmatprep.subr.mxu0 0.0
    %295 = vmatpush1.xpose.msra.mxu0 0.0
    %296 = vmatprep.subr.mxu0 0.0
    %297 = vmatpush1.xpose.msra.mxu0 0.0
    %298 = vmatprep.subr.mxu0 0.0
    %299 = vmatpush1.xpose.msra.mxu0 0.0
    %300 = vmatprep.subr.mxu0 0.0
    %301 = vmatpush1.xpose.msra.mxu0 0.0
    %302 = vmatprep.subr.mxu0 0.0
    %303 = vmatpush1.xpose.msra.mxu0 0.0
    %304 = vmatprep.subr.mxu0 0.0
    %305 = vmatpush1.xpose.msra.mxu0 0.0
    %306 = vmatprep.subr.mxu0 0.0
    %307 = vmatpush1.xpose.msra.mxu0 0.0
    %308 = vmatprep.subr.mxu0 0.0
    %309 = vmatpush1.xpose.msra.mxu0 0.0
    %310 = vmatprep.subr.mxu0 0.0
    %311 = vmatpush1.xpose.msra.mxu0 0.0
    %312 = vmatprep.mubr.f32.mxu0 0.0
    %313 = vmatmul.mubr.f32.gmra.mrb[0].mxu0 %v240
    %v314 = vpop.f32.mrb[0].mxu0
    %v315 = vadd.f32 0.0, %v314
    %v316 = vpop.f32.mrb[0].mxu0
    %317 = vdwg.mxu0
    %v319 = vsel %vm80, %v63, 0
    %v322 = vsel %vm80, %v70, 0
    %v325 = vsel %vm80, %v71, 0
    %327 = vmatprep.subr.mxu0 0.0
    %328 = vmatpush1.xpose.msra.mxu0 %v322
    %329 = vmatprep.subr.mxu0 0.0
    %330 = vmatpush1.xpose.msra.mxu0 %v325
    %331 = vmatprep.subr.mxu0 0.0
    %332 = vmatpush1.xpose.msra.mxu0 0.0
    %333 = vmatprep.subr.mxu0 0.0
    %334 = vmatpush1.xpose.msra.mxu0 0.0
    %335 = vmatprep.subr.mxu0 0.0
    %336 = vmatpush1.xpose.msra.mxu0 0.0
    %337 = vmatprep.subr.mxu0 0.0
    %338 = vmatpush1.xpose.msra.mxu0 0.0
    %339 = vmatprep.subr.mxu0 0.0
    %340 = vmatpush1.xpose.msra.mxu0 0.0
    %341 = vmatprep.subr.mxu0 0.0
    %342 = vmatpush1.xpose.msra.mxu0 0.0
    %343 = vmatprep.subr.mxu0 0.0
    %344 = vmatpush1.xpose.msra.mxu0 0.0
    %345 = vmatprep.subr.mxu0 0.0
    %346 = vmatpush1.xpose.msra.mxu0 0.0
    %347 = vmatprep.subr.mxu0 0.0
    %348 = vmatpush1.xpose.msra.mxu0 0.0
    %349 = vmatprep.subr.mxu0 0.0
    %350 = vmatpush1.xpose.msra.mxu0 0.0
    %351 = vmatprep.subr.mxu0 0.0
    %352 = vmatpush1.xpose.msra.mxu0 0.0
    %353 = vmatprep.subr.mxu0 0.0
    %354 = vmatpush1.xpose.msra.mxu0 0.0
    %355 = vmatprep.subr.mxu0 0.0
    %356 = vmatpush1.xpose.msra.mxu0 0.0
    %357 = vmatprep.subr.mxu0 0.0
    %358 = vmatpush1.xpose.msra.mxu0 0.0
    %359 = vmatprep.subr.mxu0 0.0
    %360 = vmatpush1.xpose.msra.mxu0 0.0
    %361 = vmatprep.subr.mxu0 0.0
    %362 = vmatpush1.xpose.msra.mxu0 0.0
    %363 = vmatprep.subr.mxu0 0.0
    %364 = vmatpush1.xpose.msra.mxu0 0.0
    %365 = vmatprep.subr.mxu0 0.0
    %366 = vmatpush1.xpose.msra.mxu0 0.0
    %367 = vmatprep.subr.mxu0 0.0
    %368 = vmatpush1.xpose.msra.mxu0 0.0
    %369 = vmatprep.subr.mxu0 0.0
    %370 = vmatpush1.xpose.msra.mxu0 0.0
    %371 = vmatprep.subr.mxu0 0.0
    %372 = vmatpush1.xpose.msra.mxu0 0.0
    %373 = vmatprep.subr.mxu0 0.0
    %374 = vmatpush1.xpose.msra.mxu0 0.0
    %375 = vmatprep.subr.mxu0 0.0
    %376 = vmatpush1.xpose.msra.mxu0 0.0
    %377 = vmatprep.subr.mxu0 0.0
    %378 = vmatpush1.xpose.msra.mxu0 0.0
    %379 = vmatprep.subr.mxu0 0.0
    %380 = vmatpush1.xpose.msra.mxu0 0.0
    %381 = vmatprep.subr.mxu0 0.0
    %382 = vmatpush1.xpose.msra.mxu0 0.0
    %383 = vmatprep.subr.mxu0 0.0
    %384 = vmatpush1.xpose.msra.mxu0 0.0
    %385 = vmatprep.subr.mxu0 0.0
    %386 = vmatpush1.xpose.msra.mxu0 0.0
    %387 = vmatprep.subr.mxu0 0.0
    %388 = vmatpush1.xpose.msra.mxu0 0.0
    %389 = vmatprep.subr.mxu0 0.0
    %390 = vmatpush1.xpose.msra.mxu0 0.0
    %391 = vmatprep.mubr.f32.mxu0 0.0
    %392 = vmatmul.mubr.f32.gmra.mrb[0].mxu0 %v319
    %v393 = vpop.f32.mrb[0].mxu0
    %v394 = vadd.f32 0.0, %v393
    %v395 = vpop.f32.mrb[0].mxu0
    %396 = vdwg.mxu0
    %vm397 = vcmask 130048
    %v398 = vsel %vm397, %v157, 0.0
    %399 = vadd.xlane.f32.xlu0 %v398
    %v400 = vpop.xlane.xlu0 %399
    %v401 = vsel %vm397, %v236, 0.0
    %402 = vadd.xlane.f32.xlu0 %v401
    %v403 = vpop.xlane.xlu0 %402
    %v404 = vsel %vm397, %v315, 0.0
    %405 = vadd.xlane.f32.xlu0 %v404
    %v406 = vpop.xlane.xlu0 %405
    %v407 = vsel %vm397, %v394, 0.0
    %408 = vadd.xlane.f32.xlu0 %v407
    %v409 = vpop.xlane.xlu0 %408
    %v410 = vrot.slane %v400, 4
    %v411 = vadd.f32 %v400, %v410
    %v412 = vrot.slane %v411, 2
    %v413 = vadd.f32 %v411, %v412
    %v414 = vrot.slane %v413, 1
    %v415 = vadd.f32 %v413, %v414
    %v416 = vrot.slane %v403, 4
    %v417 = vadd.f32 %v403, %v416
    %v418 = vrot.slane %v417, 2
    %v419 = vadd.f32 %v417, %v418
    %v420 = vrot.slane %v419, 1
    %v421 = vadd.f32 %v419, %v420
    %v422 = vrot.slane %v406, 4
    %v423 = vadd.f32 %v406, %v422
    %v424 = vrot.slane %v423, 2
    %v425 = vadd.f32 %v423, %v424
    %v426 = vrot.slane %v425, 1
    %v427 = vadd.f32 %v425, %v426
    %v428 = vrot.slane %v409, 4
    %v429 = vadd.f32 %v409, %v428
    %v430 = vrot.slane %v429, 2
    %v431 = vadd.f32 %v429, %v430
    %v432 = vrot.slane %v431, 1
    %v433 = vadd.f32 %v431, %v432
    %v434 = vmul.f32 %v157, %v157
    %v435 = vmul.f32 %v236, %v236
    %v436 = vmul.f32 %v315, %v315
    %v437 = vmul.f32 %v394, %v394
    %v438 = vsel %vm397, %v434, 0.0
    %439 = vadd.xlane.f32.xlu0 %v438
    %v440 = vpop.xlane.xlu0 %439
    %v441 = vsel %vm397, %v435, 0.0
    %442 = vadd.xlane.f32.xlu0 %v441
    %v443 = vpop.xlane.xlu0 %442
    %v444 = vsel %vm397, %v436, 0.0
    %445 = vadd.xlane.f32.xlu0 %v444
    %v446 = vpop.xlane.xlu0 %445
    %v447 = vsel %vm397, %v437, 0.0
    %448 = vadd.xlane.f32.xlu0 %v447
    %v449 = vpop.xlane.xlu0 %448
    %v450 = vrot.slane %v440, 4
    %v451 = vadd.f32 %v440, %v450
    %v452 = vrot.slane %v451, 2
    %v453 = vadd.f32 %v451, %v452
    %v454 = vrot.slane %v453, 1
    %v455 = vadd.f32 %v453, %v454
    %v456 = vrot.slane %v443, 4
    %v457 = vadd.f32 %v443, %v456
    %v458 = vrot.slane %v457, 2
    %v459 = vadd.f32 %v457, %v458
    %v460 = vrot.slane %v459, 1
    %v461 = vadd.f32 %v459, %v460
    %v462 = vrot.slane %v446, 4
    %v463 = vadd.f32 %v446, %v462
    %v464 = vrot.slane %v463, 2
    %v465 = vadd.f32 %v463, %v464
    %v466 = vrot.slane %v465, 1
    %v467 = vadd.f32 %v465, %v466
    %v468 = vrot.slane %v449, 4
    %v469 = vadd.f32 %v449, %v468
    %v470 = vrot.slane %v469, 2
    %v471 = vadd.f32 %v469, %v470
    %v472 = vrot.slane %v471, 1
    %v473 = vadd.f32 %v471, %v472
    %v474 = vmul.f32 %v415, 0.0078125
    %v475 = vmul.f32 %v421, 0.0078125
    %v476 = vmul.f32 %v427, 0.0078125
    %v477 = vmul.f32 %v433, 0.0078125
    %v478 = vmul.f32 %v455, 0.0078125
    %v479 = vmul.f32 %v461, 0.0078125
    %v480 = vmul.f32 %v467, 0.0078125
    %v481 = vmul.f32 %v473, 0.0078125
    %v482 = vmul.f32 %v474, %v474
    %v483 = vmul.f32 %v475, %v475
    %v484 = vmul.f32 %v476, %v476
    %v485 = vmul.f32 %v477, %v477
    %v486 = vsub.f32 %v478, %v482
    %v487 = vsub.f32 %v479, %v483
    %v488 = vsub.f32 %v480, %v484
    %v489 = vsub.f32 %v481, %v485
    %v490 = vmax.f32 %v486, 0.0
    %v491 = vmax.f32 %v487, 0.0
    %v492 = vmax.f32 %v488, 0.0
    %v493 = vmax.f32 %v489, 0.0
    %v494 = vsub.f32 %v157, %v474
    %v495 = vsub.f32 %v236, %v475
    %v496 = vsub.f32 %v315, %v476
    %v497 = vsub.f32 %v394, %v477
    %v498 = vadd.f32 %v490, 1e-05
    %v499 = vadd.f32 %v491, 1e-05
    %v500 = vadd.f32 %v492, 1e-05
    %v501 = vadd.f32 %v493, 1e-05
    %v502 = vrsqrt.pop %v498
    %v503 = vrsqrt.pop %v499
    %v504 = vrsqrt.pop %v500
    %v505 = vrsqrt.pop %v501
    %v506 = vmul.f32 %v494, %v502
    %v507 = vmul.f32 %v495, %v503
    %v508 = vmul.f32 %v496, %v504
    %v509 = vmul.f32 %v497, %v505
    %v510 = vlaneseq
    %v511 = vand.u32 %v510, 127
    %v512 = vsel %vm397, %v506, -inf
    %513 = vmax.xlane.f32.xlu0 %v512
    %v514 = vpop.xlane.xlu0 %513
    %v515 = vsel %vm397, %v507, -inf
    %516 = vmax.xlane.f32.xlu0 %v515
    %v517 = vpop.xlane.xlu0 %516
    %v518 = vsel %vm397, %v508, -inf
    %519 = vmax.xlane.f32.xlu0 %v518
    %v520 = vpop.xlane.xlu0 %519
    %v521 = vsel %vm397, %v509, -inf
    %522 = vmax.xlane.f32.xlu0 %v521
    %v523 = vpop.xlane.xlu0 %522
    %vm524 = vcmp.ge.f32.partialorder %v506, %v514
    %vm525 = vcmp.ge.f32.partialorder %v507, %v517
    %vm526 = vcmp.ge.f32.partialorder %v508, %v520
    %vm527 = vcmp.ge.f32.partialorder %v509, %v523
    %v528 = vsel %vm524, %v511, 16
    %v529 = vsel %vm525, %v511, 16
    %v530 = vsel %vm526, %v511, 16
    %v531 = vsel %vm527, %v511, 16
    %v532 = vsel %vm397, %v528, 2147483647
    %v533 = vand.u32 %v532, 65535
    %v534 = vshra.s32 %v532, 16
    %v535 = vcvt.s32.f32 %v533
    %v536 = vcvt.s32.f32 %v534
    %537 = vmin.xlane.f32.xlu0 %v536
    %v538 = vpop.xlane.xlu0 %537
    %vm539 = vcmp.eq.f32.partialorder %v536, %v538
    %v540 = vsel %vm539, %v535, inf
    %541 = vmin.xlane.f32.xlu0 %v540
    %v542 = vpop.xlane.xlu0 %541
    %v543 = vcvt.f32.s32 %v542
    %v544 = vcvt.f32.s32 %v538
    %v545 = vshll.u32 %v544, 16
    %v546 = vadd.s32 %v545, %v543
    %v547 = vsel %vm397, %v529, 2147483647
    %v548 = vand.u32 %v547, 65535
    %v549 = vshra.s32 %v547, 16
    %v550 = vcvt.s32.f32 %v548
    %v551 = vcvt.s32.f32 %v549
    %552 = vmin.xlane.f32.xlu0 %v551
    %v553 = vpop.xlane.xlu0 %552
    %vm554 = vcmp.eq.f32.partialorder %v551, %v553
    %v555 = vsel %vm554, %v550, inf
    %556 = vmin.xlane.f32.xlu0 %v555
    %v557 = vpop.xlane.xlu0 %556
    %v558 = vcvt.f32.s32 %v557
    %v559 = vcvt.f32.s32 %v553
    %v560 = vshll.u32 %v559, 16
    %v561 = vadd.s32 %v560, %v558
    %v562 = vsel %vm397, %v530, 2147483647
    %v563 = vand.u32 %v562, 65535
    %v564 = vshra.s32 %v562, 16
    %v565 = vcvt.s32.f32 %v563
    %v566 = vcvt.s32.f32 %v564
    %567 = vmin.xlane.f32.xlu0 %v566
    %v568 = vpop.xlane.xlu0 %567
    %vm569 = vcmp.eq.f32.partialorder %v566, %v568
    %v570 = vsel %vm569, %v565, inf
    %571 = vmin.xlane.f32.xlu0 %v570
    %v572 = vpop.xlane.xlu0 %571
    %v573 = vcvt.f32.s32 %v572
    %v574 = vcvt.f32.s32 %v568
    %v575 = vshll.u32 %v574, 16
    %v576 = vadd.s32 %v575, %v573
    %v577 = vsel %vm397, %v531, 2147483647
    %v578 = vand.u32 %v577, 65535
    %v579 = vshra.s32 %v577, 16
    %v580 = vcvt.s32.f32 %v578
    %v581 = vcvt.s32.f32 %v579
    %582 = vmin.xlane.f32.xlu0 %v581
    %v583 = vpop.xlane.xlu0 %582
    %vm584 = vcmp.eq.f32.partialorder %v581, %v583
    %v585 = vsel %vm584, %v580, inf
    %586 = vmin.xlane.f32.xlu0 %v585
    %v587 = vpop.xlane.xlu0 %586
    %v588 = vcvt.f32.s32 %v587
    %v589 = vcvt.f32.s32 %v583
    %v590 = vshll.u32 %v589, 16
    %v591 = vadd.s32 %v590, %v588
    %vm592 = vcmp.eq.s32.totalorder %v511, %v546
    %vm593 = vcmp.eq.s32.totalorder %v511, %v561
    %vm594 = vcmp.eq.s32.totalorder %v511, %v576
    %vm595 = vcmp.eq.s32.totalorder %v511, %v591
    %v596 = vsel %vm592, 1, 0
    %v597 = vsel %vm593, 1, 0
    %v598 = vsel %vm594, 1, 0
    %v599 = vsel %vm595, 1, 0
    %v600 = vcvt.s32.f32 %v596
    %v601 = vcvt.s32.f32 %v597
    %v602 = vcvt.s32.f32 %v598
    %v603 = vcvt.s32.f32 %v599
    %v605 = vsel %vm397, %v600, 0
    %607 = vmatprep.subr.mxu0 0.0
    %608 = vmatpush1.msra.mxu0 %v72
    %609 = vmatprep.subr.mxu0 0.0
    %610 = vmatpush1.msra.mxu0 %v73
    %611 = vmatprep.subr.mxu0 0.0
    %612 = vmatpush1.msra.mxu0 0.0
    %613 = vmatprep.subr.mxu0 0.0
    %614 = vmatpush1.msra.mxu0 0.0
    %615 = vmatprep.subr.mxu0 0.0
    %616 = vmatpush1.msra.mxu0 0.0
    %617 = vmatprep.subr.mxu0 0.0
    %618 = vmatpush1.msra.mxu0 0.0
    %619 = vmatprep.subr.mxu0 0.0
    %620 = vmatpush1.msra.mxu0 0.0
    %621 = vmatprep.subr.mxu0 0.0
    %622 = vmatpush1.msra.mxu0 0.0
    %623 = vmatprep.subr.mxu0 0.0
    %624 = vmatpush1.msra.mxu0 0.0
    %625 = vmatprep.subr.mxu0 0.0
    %626 = vmatpush1.msra.mxu0 0.0
    %627 = vmatprep.subr.mxu0 0.0
    %628 = vmatpush1.msra.mxu0 0.0
    %629 = vmatprep.subr.mxu0 0.0
    %630 = vmatpush1.msra.mxu0 0.0
    %631 = vmatprep.subr.mxu0 0.0
    %632 = vmatpush1.msra.mxu0 0.0
    %633 = vmatprep.subr.mxu0 0.0
    %634 = vmatpush1.msra.mxu0 0.0
    %635 = vmatprep.subr.mxu0 0.0
    %636 = vmatpush1.msra.mxu0 0.0
    %637 = vmatprep.subr.mxu0 0.0
    %638 = vmatpush1.msra.mxu0 0.0
    %639 = vmatprep.subr.mxu0 0.0
    %640 = vmatpush1.msra.mxu0 0.0
    %641 = vmatprep.subr.mxu0 0.0
    %642 = vmatpush1.msra.mxu0 0.0
    %643 = vmatprep.subr.mxu0 0.0
    %644 = vmatpush1.msra.mxu0 0.0
    %645 = vmatprep.subr.mxu0 0.0
    %646 = vmatpush1.msra.mxu0 0.0
    %647 = vmatprep.subr.mxu0 0.0
    %648 = vmatpush1.msra.mxu0 0.0
    %649 = vmatprep.subr.mxu0 0.0
    %650 = vmatpush1.msra.mxu0 0.0
    %651 = vmatprep.subr.mxu0 0.0
    %652 = vmatpush1.msra.mxu0 0.0
    %653 = vmatprep.subr.mxu0 0.0
    %654 = vmatpush1.msra.mxu0 0.0
    %655 = vmatprep.subr.mxu0 0.0
    %656 = vmatpush1.msra.mxu0 0.0
    %657 = vmatprep.subr.mxu0 0.0
    %658 = vmatpush1.msra.mxu0 0.0
    %659 = vmatprep.subr.mxu0 0.0
    %660 = vmatpush1.msra.mxu0 0.0
    %661 = vmatprep.subr.mxu0 0.0
    %662 = vmatpush1.msra.mxu0 0.0
    %663 = vmatprep.subr.mxu0 0.0
    %664 = vmatpush1.msra.mxu0 0.0
    %665 = vmatprep.subr.mxu0 0.0
    %666 = vmatpush1.msra.mxu0 0.0
    %667 = vmatprep.subr.mxu0 0.0
    %668 = vmatpush1.msra.mxu0 0.0
    %669 = vmatprep.subr.mxu0 0.0
    %670 = vmatpush1.msra.mxu0 0.0
    %671 = vmatprep.mubr.f32.mxu0 0.0
    %672 = vmatmul.mubr.f32.gmra.mrb[0].mxu0 %v605
    %v673 = vpop.f32.mrb[0].mxu0
    %v674 = vadd.f32 0.0, %v673
    %v675 = vpop.f32.mrb[0].mxu0
    %676 = vdwg.mxu0
    %v678 = vsel %vm397, %v601, 0
    %680 = vmatprep.subr.mxu0 0.0
    %681 = vmatpush1.msra.mxu0 %v74
    %682 = vmatprep.subr.mxu0 0.0
    %683 = vmatpush1.msra.mxu0 %v75
    %684 = vmatprep.subr.mxu0 0.0
    %685 = vmatpush1.msra.mxu0 0.0
    %686 = vmatprep.subr.mxu0 0.0
    %687 = vmatpush1.msra.mxu0 0.0
    %688 = vmatprep.subr.mxu0 0.0
    %689 = vmatpush1.msra.mxu0 0.0
    %690 = vmatprep.subr.mxu0 0.0
    %691 = vmatpush1.msra.mxu0 0.0
    %692 = vmatprep.subr.mxu0 0.0
    %693 = vmatpush1.msra.mxu0 0.0
    %694 = vmatprep.subr.mxu0 0.0
    %695 = vmatpush1.msra.mxu0 0.0
    %696 = vmatprep.subr.mxu0 0.0
    %697 = vmatpush1.msra.mxu0 0.0
    %698 = vmatprep.subr.mxu0 0.0
    %699 = vmatpush1.msra.mxu0 0.0
    %700 = vmatprep.subr.mxu0 0.0
    %701 = vmatpush1.msra.mxu0 0.0
    %702 = vmatprep.subr.mxu0 0.0
    %703 = vmatpush1.msra.mxu0 0.0
    %704 = vmatprep.subr.mxu0 0.0
    %705 = vmatpush1.msra.mxu0 0.0
    %706 = vmatprep.subr.mxu0 0.0
    %707 = vmatpush1.msra.mxu0 0.0
    %708 = vmatprep.subr.mxu0 0.0
    %709 = vmatpush1.msra.mxu0 0.0
    %710 = vmatprep.subr.mxu0 0.0
    %711 = vmatpush1.msra.mxu0 0.0
    %712 = vmatprep.subr.mxu0 0.0
    %713 = vmatpush1.msra.mxu0 0.0
    %714 = vmatprep.subr.mxu0 0.0
    %715 = vmatpush1.msra.mxu0 0.0
    %716 = vmatprep.subr.mxu0 0.0
    %717 = vmatpush1.msra.mxu0 0.0
    %718 = vmatprep.subr.mxu0 0.0
    %719 = vmatpush1.msra.mxu0 0.0
    %720 = vmatprep.subr.mxu0 0.0
    %721 = vmatpush1.msra.mxu0 0.0
    %722 = vmatprep.subr.mxu0 0.0
    %723 = vmatpush1.msra.mxu0 0.0
    %724 = vmatprep.subr.mxu0 0.0
    %725 = vmatpush1.msra.mxu0 0.0
    %726 = vmatprep.subr.mxu0 0.0
    %727 = vmatpush1.msra.mxu0 0.0
    %728 = vmatprep.subr.mxu0 0.0
    %729 = vmatpush1.msra.mxu0 0.0
    %730 = vmatprep.subr.mxu0 0.0
    %731 = vmatpush1.msra.mxu0 0.0
    %732 = vmatprep.subr.mxu0 0.0
    %733 = vmatpush1.msra.mxu0 0.0
    %734 = vmatprep.subr.mxu0 0.0
    %735 = vmatpush1.msra.mxu0 0.0
    %736 = vmatprep.subr.mxu0 0.0
    %737 = vmatpush1.msra.mxu0 0.0
    %738 = vmatprep.subr.mxu0 0.0
    %739 = vmatpush1.msra.mxu0 0.0
    %740 = vmatprep.subr.mxu0 0.0
    %741 = vmatpush1.msra.mxu0 0.0
    %742 = vmatprep.subr.mxu0 0.0
    %743 = vmatpush1.msra.mxu0 0.0
    %744 = vmatprep.mubr.f32.mxu0 0.0
    %745 = vmatmul.mubr.f32.gmra.mrb[0].mxu0 %v678
    %v746 = vpop.f32.mrb[0].mxu0
    %v747 = vadd.f32 0.0, %v746
    %v748 = vpop.f32.mrb[0].mxu0
    %749 = vdwg.mxu0
    %v751 = vsel %vm397, %v602, 0
    %753 = vmatprep.subr.mxu0 0.0
    %754 = vmatpush1.msra.mxu0 %v76
    %755 = vmatprep.subr.mxu0 0.0
    %756 = vmatpush1.msra.mxu0 %v77
    %757 = vmatprep.subr.mxu0 0.0
    %758 = vmatpush1.msra.mxu0 0.0
    %759 = vmatprep.subr.mxu0 0.0
    %760 = vmatpush1.msra.mxu0 0.0
    %761 = vmatprep.subr.mxu0 0.0
    %762 = vmatpush1.msra.mxu0 0.0
    %763 = vmatprep.subr.mxu0 0.0
    %764 = vmatpush1.msra.mxu0 0.0
    %765 = vmatprep.subr.mxu0 0.0
    %766 = vmatpush1.msra.mxu0 0.0
    %767 = vmatprep.subr.mxu0 0.0
    %768 = vmatpush1.msra.mxu0 0.0
    %769 = vmatprep.subr.mxu0 0.0
    %770 = vmatpush1.msra.mxu0 0.0
    %771 = vmatprep.subr.mxu0 0.0
    %772 = vmatpush1.msra.mxu0 0.0
    %773 = vmatprep.subr.mxu0 0.0
    %774 = vmatpush1.msra.mxu0 0.0
    %775 = vmatprep.subr.mxu0 0.0
    %776 = vmatpush1.msra.mxu0 0.0
    %777 = vmatprep.subr.mxu0 0.0
    %778 = vmatpush1.msra.mxu0 0.0
    %779 = vmatprep.subr.mxu0 0.0
    %780 = vmatpush1.msra.mxu0 0.0
    %781 = vmatprep.subr.mxu0 0.0
    %782 = vmatpush1.msra.mxu0 0.0
    %783 = vmatprep.subr.mxu0 0.0
    %784 = vmatpush1.msra.mxu0 0.0
    %785 = vmatprep.subr.mxu0 0.0
    %786 = vmatpush1.msra.mxu0 0.0
    %787 = vmatprep.subr.mxu0 0.0
    %788 = vmatpush1.msra.mxu0 0.0
    %789 = vmatprep.subr.mxu0 0.0
    %790 = vmatpush1.msra.mxu0 0.0
    %791 = vmatprep.subr.mxu0 0.0
    %792 = vmatpush1.msra.mxu0 0.0
    %793 = vmatprep.subr.mxu0 0.0
    %794 = vmatpush1.msra.mxu0 0.0
    %795 = vmatprep.subr.mxu0 0.0
    %796 = vmatpush1.msra.mxu0 0.0
    %797 = vmatprep.subr.mxu0 0.0
    %798 = vmatpush1.msra.mxu0 0.0
    %799 = vmatprep.subr.mxu0 0.0
    %800 = vmatpush1.msra.mxu0 0.0
    %801 = vmatprep.subr.mxu0 0.0
    %802 = vmatpush1.msra.mxu0 0.0
    %803 = vmatprep.subr.mxu0 0.0
    %804 = vmatpush1.msra.mxu0 0.0
    %805 = vmatprep.subr.mxu0 0.0
    %806 = vmatpush1.msra.mxu0 0.0
    %807 = vmatprep.subr.mxu0 0.0
    %808 = vmatpush1.msra.mxu0 0.0
    %809 = vmatprep.subr.mxu0 0.0
    %810 = vmatpush1.msra.mxu0 0.0
    %811 = vmatprep.subr.mxu0 0.0
    %812 = vmatpush1.msra.mxu0 0.0
    %813 = vmatprep.subr.mxu0 0.0
    %814 = vmatpush1.msra.mxu0 0.0
    %815 = vmatprep.subr.mxu0 0.0
    %816 = vmatpush1.msra.mxu0 0.0
    %817 = vmatprep.mubr.f32.mxu0 0.0
    %818 = vmatmul.mubr.f32.gmra.mrb[0].mxu0 %v751
    %v819 = vpop.f32.mrb[0].mxu0
    %v820 = vadd.f32 0.0, %v819
    %v821 = vpop.f32.mrb[0].mxu0
    %822 = vdwg.mxu0
    %v824 = vsel %vm397, %v603, 0
    %826 = vmatprep.subr.mxu0 0.0
    %827 = vmatpush1.msra.mxu0 %v78
    %828 = vmatprep.subr.mxu0 0.0
    %829 = vmatpush1.msra.mxu0 %v79
    %830 = vmatprep.subr.mxu0 0.0
    %831 = vmatpush1.msra.mxu0 0.0
    %832 = vmatprep.subr.mxu0 0.0
    %833 = vmatpush1.msra.mxu0 0.0
    %834 = vmatprep.subr.mxu0 0.0
    %835 = vmatpush1.msra.mxu0 0.0
    %836 = vmatprep.subr.mxu0 0.0
    %837 = vmatpush1.msra.mxu0 0.0
    %838 = vmatprep.subr.mxu0 0.0
    %839 = vmatpush1.msra.mxu0 0.0
    %840 = vmatprep.subr.mxu0 0.0
    %841 = vmatpush1.msra.mxu0 0.0
    %842 = vmatprep.subr.mxu0 0.0
    %843 = vmatpush1.msra.mxu0 0.0
    %844 = vmatprep.subr.mxu0 0.0
    %845 = vmatpush1.msra.mxu0 0.0
    %846 = vmatprep.subr.mxu0 0.0
    %847 = vmatpush1.msra.mxu0 0.0
    %848 = vmatprep.subr.mxu0 0.0
    %849 = vmatpush1.msra.mxu0 0.0
    %850 = vmatprep.subr.mxu0 0.0
    %851 = vmatpush1.msra.mxu0 0.0
    %852 = vmatprep.subr.mxu0 0.0
    %853 = vmatpush1.msra.mxu0 0.0
    %854 = vmatprep.subr.mxu0 0.0
    %855 = vmatpush1.msra.mxu0 0.0
    %856 = vmatprep.subr.mxu0 0.0
    %857 = vmatpush1.msra.mxu0 0.0
    %858 = vmatprep.subr.mxu0 0.0
    %859 = vmatpush1.msra.mxu0 0.0
    %860 = vmatprep.subr.mxu0 0.0
    %861 = vmatpush1.msra.mxu0 0.0
    %862 = vmatprep.subr.mxu0 0.0
    %863 = vmatpush1.msra.mxu0 0.0
    %864 = vmatprep.subr.mxu0 0.0
    %865 = vmatpush1.msra.mxu0 0.0
    %866 = vmatprep.subr.mxu0 0.0
    %867 = vmatpush1.msra.mxu0 0.0
    %868 = vmatprep.subr.mxu0 0.0
    %869 = vmatpush1.msra.mxu0 0.0
    %870 = vmatprep.subr.mxu0 0.0
    %871 = vmatpush1.msra.mxu0 0.0
    %872 = vmatprep.subr.mxu0 0.0
    %873 = vmatpush1.msra.mxu0 0.0
    %874 = vmatprep.subr.mxu0 0.0
    %875 = vmatpush1.msra.mxu0 0.0
    %876 = vmatprep.subr.mxu0 0.0
    %877 = vmatpush1.msra.mxu0 0.0
    %878 = vmatprep.subr.mxu0 0.0
    %879 = vmatpush1.msra.mxu0 0.0
    %880 = vmatprep.subr.mxu0 0.0
    %881 = vmatpush1.msra.mxu0 0.0
    %882 = vmatprep.subr.mxu0 0.0
    %883 = vmatpush1.msra.mxu0 0.0
    %884 = vmatprep.subr.mxu0 0.0
    %885 = vmatpush1.msra.mxu0 0.0
    %886 = vmatprep.subr.mxu0 0.0
    %887 = vmatpush1.msra.mxu0 0.0
    %888 = vmatprep.subr.mxu0 0.0
    %889 = vmatpush1.msra.mxu0 0.0
    %890 = vmatprep.mubr.f32.mxu0 0.0
    %891 = vmatmul.mubr.f32.gmra.mrb[0].mxu0 %v824
    %v892 = vpop.f32.mrb[0].mxu0
    %v893 = vadd.f32 0.0, %v892
    %v894 = vpop.f32.mrb[0].mxu0
    %895 = vdwg.mxu0
    %v896 = vlaneseq
    %v897 = vshrl.u32 %v896, 7
    %v898 = vsub.s32 %v511, %v897
    %v899 = vrot.slane %v546, %v898
    %v900 = vlaneseq
    %v901 = vshrl.u32 %v900, 7
    %v902 = vsub.s32 %v511, %v901
    %v903 = vrot.slane %v561, %v902
    %v904 = vlaneseq
    %v905 = vshrl.u32 %v904, 7
    %v906 = vsub.s32 %v511, %v905
    %v907 = vrot.slane %v576, %v906
    %v908 = vlaneseq
    %v909 = vshrl.u32 %v908, 7
    %v910 = vsub.s32 %v511, %v909
    %v911 = vrot.slane %v591, %v910
    %vm912 = vcmask 1041409
    %v913 = vsel %vm912, %v903, %v899
    %vm914 = vcmask 1042434
    %v915 = vsel %vm914, %v907, %v913
    %vm916 = vcmask 1043459
    %v917 = vsel %vm916, %v911, %v915
    %vm918 = vcmask 60416
    %919 = vst.msk [vmem:[#allocation8] sm:$0xf] %vm918, %v917
    %920 = vst.msk [vmem:[#allocation9] sm:$0xff] %vm80, %v674
    %921 = vst.msk [vmem:[#allocation9 + $0x8] sm:$0xff] %vm80, %v747
    %922 = vst.msk [vmem:[#allocation9 + $0x10] sm:$0xff] %vm80, %v820
    %923 = vst.msk [vmem:[#allocation9 + $0x18] sm:$0xff] %vm80, %v893
    %v924 = vsub.f32 %v674, %v60
    %v925 = vsub.f32 %v747, %v61
    %v926 = vsub.f32 %v820, %v62
    %v927 = vsub.f32 %v893, %v63
    %v928 = vmul.f32 %v924, %v924
    %v929 = vmul.f32 %v925, %v925
    %v930 = vmul.f32 %v926, %v926
    %v931 = vmul.f32 %v927, %v927
    %v932 = vsel %vm80, %v928, 0.0
    %v933 = vsel %vm80, %v929, 0.0
    %v934 = vadd.f32 %v932, %v933
    %v935 = vsel %vm80, %v930, 0.0
    %v936 = vadd.f32 %v934, %v935
    %v937 = vsel %vm80, %v931, 0.0
    %v938 = vadd.f32 %v936, %v937
    %939 = vadd.xlane.f32.xlu0 %v938
    %v940 = vpop.xlane.xlu0 %939
    %v941 = vrot.slane %v940, 4
    %v942 = vadd.f32 %v940, %v941
    %v943 = vrot.slane %v942, 2
    %v944 = vadd.f32 %v942, %v943
    %v945 = vrot.slane %v944, 1
    %v946 = vadd.f32 %v944, %v945
    %s947 = vtos %v946
    %v948 = vstv %s947
    %949 = vst [vmem:[#allocation11] sm:$0xff] %v948
    // Predicated region
    $region26: #{tpu_custom_call.1} parent=1 // pred_check
      _
    $region27: #{tpu_custom_call.1} parent=1 // pred_check_branch
      %951 = sbr.rel (0) target = $region29
    $region28: #{tpu_custom_call.1} parent=1 // pred_region
      %s953 = ssub.s32 64, 64
      %954 = vsyncadd [#allocation4], %s953
      %s956 = sshll.u32 [#allocation8], 4
      %s957 = int_to_ptr.vmem [resolvable:$true] %s956
      %959 = dma.vmem_to_hbm [thread:$0]  %s957, 64, %s3, [#allocation4]
    $region29: #{tpu_custom_call.1} parent=1 // pred_fallthru
      _
    // Predicated region
    $region30: #{tpu_custom_call.1} parent=1 // pred_check
      _
    $region31: #{tpu_custom_call.1} parent=1 // pred_check_branch
      %961 = sbr.rel (0) target = $region33
    $region32: #{tpu_custom_call.1} parent=1 // pred_region
      %s963 = ssub.s32 512, 512
      %964 = vsyncadd [#allocation10], %s963
      %s965 = sshll.u32 [#allocation9], 4
      %s966 = int_to_ptr.vmem [resolvable:$true] %s965
      %971 = dma.vmem_to_hbm [thread:$0]  %s966, 512, %s4, [#allocation10], 128, 128, 8
    $region33: #{tpu_custom_call.1} parent=1 // pred_fallthru
      _
    // Predicated region
    $region34: #{tpu_custom_call.1} parent=1 // pred_check
      _
    $region35: #{tpu_custom_call.1} parent=1 // pred_check_branch
      %973 = sbr.rel (0) target = $region37
    $region36: #{tpu_custom_call.1} parent=1 // pred_region
      %s975 = ssub.s32 128, 128
      %976 = vsyncadd [#allocation10], %s975
      %s978 = sshll.u32 [#allocation11], 4
      %s979 = int_to_ptr.vmem [resolvable:$true] %s978
      %981 = dma.vmem_to_hbm [thread:$0]  %s979, 128, %s5, [#allocation10]
    $region37: #{tpu_custom_call.1} parent=1 // pred_fallthru
      _
    // Predicated region
    $region38: #{tpu_custom_call.1} parent=1 // pred_check
      _
    $region39: #{tpu_custom_call.1} parent=1 // pred_check_branch
      %983 = sbr.rel (0) target = $region41
    $region40: #{tpu_custom_call.1} parent=1 // pred_region
      %984 = dma.done [#allocation4], 64
    $region41: #{tpu_custom_call.1} parent=1 // pred_fallthru
      _
    // Predicated region
    $region42: #{tpu_custom_call.1} parent=1 // pred_check
      _
    $region43: #{tpu_custom_call.1} parent=1 // pred_check_branch
      %986 = sbr.rel (0) target = $region45
    $region44: #{tpu_custom_call.1} parent=1 // pred_region
      %987 = dma.done [#allocation10], 512
    $region45: #{tpu_custom_call.1} parent=1 // pred_fallthru
      _
    // Predicated region
    $region46: #{tpu_custom_call.1} parent=1 // pred_check
      _
    $region47: #{tpu_custom_call.1} parent=1 // pred_check_branch
      %989 = sbr.rel (0) target = $region49
    $region48: #{tpu_custom_call.1} parent=1 // pred_region
      %990 = dma.done [#allocation10], 128
    $region49: #{tpu_custom_call.1} parent=1 // pred_fallthru
      _
    %991 = vsyncpa [#allocation3], 1
    %992 = vsyncpa [#allocation6], 1
    %993 = vsyncpa [#allocation4], 1
    %994 = vsyncpa [#allocation10], 1

</llo_original>
